<compile_context>
chip_gen: v6e
topology: v6e:2x2x1
jax: 0.10.0
libtpu: 0.0.40
codegen_flags: <defaults>
</compile_context>

<pallas_src>
from functools import partial

import jax
import jax.numpy as jnp
from jax.experimental import pallas as pl
from jax.experimental.pallas import tpu as pltpu

HID = 128  # padded feature width used for every layer inside the kernel


def mlp_kernel(x_ref, w_ref, b_ref, o_ref):
    # x_ref: (B, 128) bf16 | w_ref: (3, 128, 128) bf16 | b_ref: (3, B, 128) f32
    # Layer 1: Linear(pad(input_size) -> 128) + ReLU
    h = jnp.dot(x_ref[...], w_ref[0], preferred_element_type=jnp.float32)
    h = jnp.maximum(h + b_ref[0], 0.0)
    # Layer 2: Linear(128 -> 64, zero-padded to 128 cols) + ReLU
    h = jnp.dot(h.astype(jnp.bfloat16), w_ref[1], preferred_element_type=jnp.float32)
    h = jnp.maximum(h + b_ref[1], 0.0)
    # Layer 3: Linear(64 -> output_size, zero-padded to 128) + sigmoid
    h = jnp.dot(h.astype(jnp.bfloat16), w_ref[2], preferred_element_type=jnp.float32)
    h = h + b_ref[2]
    o_ref[...] = jax.nn.sigmoid(h).astype(o_ref.dtype)


def pack_params(w1, b1, w2, b2, w3, b3, batch):
    """Zero-pad and stack the three layers into one weight slab + one bias slab.

    Weights are stored (in, out) so forward is x @ W + b, zero-padded to
    128x128 and cast to bf16 (MXU-native, halves the dominant DMA). Padding is
    exact: padded x lanes are zero and padded weight rows/cols are zero, so
    they contribute nothing; padded bias entries are zero and get ReLU'd /
    sliced away. Biases stay f32 and are pre-broadcast along the batch axis so
    the in-kernel bias add is a plain vreg add (no XLU sublane shuffle).
    """
    w_slab = jnp.zeros((3, HID, HID), jnp.float32)
    w_slab = w_slab.at[0, : w1.shape[0], : w1.shape[1]].set(w1)
    w_slab = w_slab.at[1, : w2.shape[0], : w2.shape[1]].set(w2)
    w_slab = w_slab.at[2, : w3.shape[0], : w3.shape[1]].set(w3)
    w_slab = w_slab.astype(jnp.bfloat16)

    b_slab = jnp.zeros((3, batch, HID), jnp.float32)
    b_slab = b_slab.at[0, :, : b1.shape[0]].set(b1[None, :])
    b_slab = b_slab.at[1, :, : b2.shape[0]].set(b2[None, :])
    b_slab = b_slab.at[2, :, : b3.shape[0]].set(b3[None, :])
    return w_slab, b_slab


@partial(jax.jit, static_argnames=("output_size",))
def mlp_forward(x, w_slab, b_slab, output_size):
    """Single fused dispatch: pad -> pallas kernel -> slice."""
    B, in_f = x.shape
    # Lane-pad the input features to 128 (zeros) and cast to bf16 for the MXU
    # (inputs are 0/1 so the cast is exact).
    x_pad = jnp.zeros((B, HID), jnp.float32).at[:, :in_f].set(x).astype(jnp.bfloat16)

    flops = 2 * B * HID * HID * 3
    bytes_accessed = (
        x_pad.size * 2 + w_slab.size * 2 + b_slab.size * 4 + B * HID * 4
    )

    out_pad = pl.pallas_call(
        mlp_kernel,
        out_shape=jax.ShapeDtypeStruct((B, HID), jnp.float32),
        # No grid: single invocation, whole arrays resident in VMEM.
        in_specs=[
            pl.BlockSpec(memory_space=pltpu.MemorySpace.VMEM),  # x_pad
            pl.BlockSpec(memory_space=pltpu.MemorySpace.VMEM),  # weight slab
            pl.BlockSpec(memory_space=pltpu.MemorySpace.VMEM),  # bias slab
        ],
        out_specs=pl.BlockSpec(memory_space=pltpu.MemorySpace.VMEM),
        cost_estimate=pl.CostEstimate(
            flops=flops,
            transcendentals=B * HID,  # sigmoid exp
            bytes_accessed=bytes_accessed,
        ),
    )(x_pad, w_slab, b_slab)

    # Lane-dense (B, 128) store inside the kernel; trim to real width here
    # (still under the same jit, so no extra dispatch).
    return out_pad[:, :output_size]


def init_params(key, input_size, output_size):
    """Deterministic init mimicking nn.Linear's U(-1/sqrt(fan_in), 1/sqrt(fan_in))."""

    def linear(k, fan_in, fan_out):
        kw, kb = jax.random.split(k)
        bound = 1.0 / jnp.sqrt(fan_in)
        # stored as (in, out) so forward is x @ W + b
        w = jax.random.uniform(kw, (fan_in, fan_out), jnp.float32, -bound, bound)
        b = jax.random.uniform(kb, (fan_out,), jnp.float32, -bound, bound)
        return w, b

    k1, k2, k3 = jax.random.split(key, 3)
    w1, b1 = linear(k1, input_size, 128)
    w2, b2 = linear(k2, 128, 64)
    w3, b3 = linear(k3, 64, output_size)
    return w1, b1, w2, b2, w3, b3


if __name__ == "__main__":
    key = jax.random.PRNGKey(0)
    k_x, k_p = jax.random.split(key)

    input_size, output_size, batch = 20, 4, 8
    # Matches torch.randint(0, 2, ...).float(): binary 0/1 inputs.
    x = jax.random.randint(k_x, (batch, input_size), 0, 2).astype(jnp.float32)

    params = init_params(k_p, input_size, output_size)
    w_slab, b_slab = pack_params(*params, batch=batch)  # host-side, once

    out = mlp_forward(x, w_slab, b_slab, output_size)
    out = jax.block_until_ready(out)

    # Sanity: sigmoid output in (0, 1)
    assert out.shape == (batch, output_size)
    assert bool(jnp.all((out > 0.0) & (out < 1.0)))

    w1, b1, w2, b2, w3, b3 = params

    # Tight cross-check against a JAX reference using the same bf16 matmul /
    # f32 accumulate path the kernel uses.
    bf = jnp.bfloat16
    h = jnp.maximum(
        jnp.dot(x.astype(bf), w1.astype(bf), preferred_element_type=jnp.float32) + b1,
        0.0,
    )
    h = jnp.maximum(
        jnp.dot(h.astype(bf), w2.astype(bf), preferred_element_type=jnp.float32) + b2,
        0.0,
    )
    ref_bf16 = jax.nn.sigmoid(
        jnp.dot(h.astype(bf), w3.astype(bf), preferred_element_type=jnp.float32) + b3
    )
    assert bool(jnp.allclose(out, ref_bf16, atol=1e-5, rtol=1e-5))

    # Loose check against the pure-f32 module semantics (bf16 weight rounding).
    h = jnp.maximum(x @ w1 + b1, 0.0)
    h = jnp.maximum(h @ w2 + b2, 0.0)
    ref_f32 = jax.nn.sigmoid(h @ w3 + b3)
    assert bool(jnp.allclose(out, ref_f32, atol=2e-2, rtol=2e-2))

    print("KERNEL_OK")
</pallas_src>

<mosaic_0001>
module attributes {stable_mosaic.version = 11 : i64} {
  func.func @mlp_kernel(%arg0: memref<8x128xbf16, #tpu.memory_space<vmem>>, %arg1: memref<3x128x128xbf16, #tpu.memory_space<vmem>>, %arg2: memref<3x8x128xf32, #tpu.memory_space<vmem>>, %arg3: memref<8x128xf32, #tpu.memory_space<vmem>>) attributes {dimension_semantics = [], scalar_prefetch = 0 : i64, scratch_operands = 0 : i64, tpu.core_type = #tpu.core_type<tc>} {
    %c0 = arith.constant 0 : index
    %c0_0 = arith.constant 0 : index
    %0 = vector.load %arg0[%c0, %c0_0] : memref<8x128xbf16, #tpu.memory_space<vmem>>, vector<8x128xbf16>
    %c0_1 = arith.constant 0 : index
    %c0_2 = arith.constant 0 : index
    %c0_3 = arith.constant 0 : index
    %1 = vector.load %arg1[%c0_1, %c0_2, %c0_3] : memref<3x128x128xbf16, #tpu.memory_space<vmem>>, vector<1x128x128xbf16>
    %2 = vector.shape_cast %1 : vector<1x128x128xbf16> to vector<128x128xbf16>
    %cst = arith.constant dense<0.000000e+00> : vector<8x128xf32>
    %3 = tpu.matmul %0, %2, %cst {dimension_numbers = #tpu.dot_dimension_numbers<[1], [0], [0], [1], [0, 0, 1, 1], [], []>} : vector<8x128xbf16>, vector<128x128xbf16>, vector<8x128xf32> -> vector<8x128xf32>
    %c0_4 = arith.constant 0 : index
    %c0_5 = arith.constant 0 : index
    %c0_6 = arith.constant 0 : index
    %4 = vector.load %arg2[%c0_4, %c0_5, %c0_6] : memref<3x8x128xf32, #tpu.memory_space<vmem>>, vector<1x8x128xf32>
    %5 = vector.shape_cast %4 : vector<1x8x128xf32> to vector<8x128xf32>
    %6 = arith.addf %3, %5 : vector<8x128xf32>
    %cst_7 = arith.constant 0.000000e+00 : f32
    %7 = vector.broadcast %cst_7 : f32 to vector<8x128xf32>
    %8 = arith.maximumf %6, %7 : vector<8x128xf32>
    %9 = arith.truncf %8 : vector<8x128xf32> to vector<8x128xbf16>
    %c1 = arith.constant 1 : index
    %c0_8 = arith.constant 0 : index
    %c0_9 = arith.constant 0 : index
    %10 = vector.load %arg1[%c1, %c0_8, %c0_9] : memref<3x128x128xbf16, #tpu.memory_space<vmem>>, vector<1x128x128xbf16>
    %11 = vector.shape_cast %10 : vector<1x128x128xbf16> to vector<128x128xbf16>
    %cst_10 = arith.constant dense<0.000000e+00> : vector<8x128xf32>
    %12 = tpu.matmul %9, %11, %cst_10 {dimension_numbers = #tpu.dot_dimension_numbers<[1], [0], [0], [1], [0, 0, 1, 1], [], []>} : vector<8x128xbf16>, vector<128x128xbf16>, vector<8x128xf32> -> vector<8x128xf32>
    %c1_11 = arith.constant 1 : index
    %c0_12 = arith.constant 0 : index
    %c0_13 = arith.constant 0 : index
    %13 = vector.load %arg2[%c1_11, %c0_12, %c0_13] : memref<3x8x128xf32, #tpu.memory_space<vmem>>, vector<1x8x128xf32>
    %14 = vector.shape_cast %13 : vector<1x8x128xf32> to vector<8x128xf32>
    %15 = arith.addf %12, %14 : vector<8x128xf32>
    %cst_14 = arith.constant 0.000000e+00 : f32
    %16 = vector.broadcast %cst_14 : f32 to vector<8x128xf32>
    %17 = arith.maximumf %15, %16 : vector<8x128xf32>
    %18 = arith.truncf %17 : vector<8x128xf32> to vector<8x128xbf16>
    %c2 = arith.constant 2 : index
    %c0_15 = arith.constant 0 : index
    %c0_16 = arith.constant 0 : index
    %19 = vector.load %arg1[%c2, %c0_15, %c0_16] : memref<3x128x128xbf16, #tpu.memory_space<vmem>>, vector<1x128x128xbf16>
    %20 = vector.shape_cast %19 : vector<1x128x128xbf16> to vector<128x128xbf16>
    %cst_17 = arith.constant dense<0.000000e+00> : vector<8x128xf32>
    %21 = tpu.matmul %18, %20, %cst_17 {dimension_numbers = #tpu.dot_dimension_numbers<[1], [0], [0], [1], [0, 0, 1, 1], [], []>} : vector<8x128xbf16>, vector<128x128xbf16>, vector<8x128xf32> -> vector<8x128xf32>
    %c2_18 = arith.constant 2 : index
    %c0_19 = arith.constant 0 : index
    %c0_20 = arith.constant 0 : index
    %22 = vector.load %arg2[%c2_18, %c0_19, %c0_20] : memref<3x8x128xf32, #tpu.memory_space<vmem>>, vector<1x8x128xf32>
    %23 = vector.shape_cast %22 : vector<1x8x128xf32> to vector<8x128xf32>
    %24 = arith.addf %21, %23 : vector<8x128xf32>
    %25 = arith.negf %24 : vector<8x128xf32>
    %26 = math.exp %25 : vector<8x128xf32>
    %cst_21 = arith.constant 1.000000e+00 : f32
    %27 = vector.broadcast %cst_21 : f32 to vector<8x128xf32>
    %28 = arith.addf %27, %26 : vector<8x128xf32>
    %29 = arith.divf %27, %28 : vector<8x128xf32>
    %c0_22 = arith.constant 0 : index
    %c0_23 = arith.constant 0 : index
    %30 = vector.load %arg3[%c0_22, %c0_23] : memref<8x128xf32, #tpu.memory_space<vmem>>, vector<8x128xf32>
    tpu.vector_store %arg3[%c0_22, %c0_23], %29 {strides = array<i32>} : memref<8x128xf32, #tpu.memory_space<vmem>>, vector<8x128xf32>,
    return
  }
}

</mosaic_0001>

<llo_original>
// kernel: mlp_forward.1
$region0: #{mlp_forward.1}
  #allocation0 [shape = 'u32[]', space=smem, size = 0x4, offset = 0x4, fixed_abs, tag = 'smem constant byte address 0x4 - core index']
  #allocation1 [shape = 'u32[144,128]{1,0:T(1,128)}', space=vmem, size = 0x12000, scoped, tag = 'internal scratch']
  %s0 = inlined_call_operand.vmem [shape: bf16[8,128], index: 0, kind: input, shape index: {}]
  %s1 = inlined_call_operand.hbm [shape: bf16[3,128,128], index: 1, kind: input, shape index: {}]
  %s2 = inlined_call_operand.vmem [shape: f32[3,8,128], index: 2, kind: input, shape index: {}]
  %s3 = inlined_call_operand.vmem [shape: f32[8,128], index: 3, kind: output, shape index: {}]
  %s4 = sld [smem:[#allocation0]]
  $region26: #{mlp_forward.1} parent=0
    _
  %s6 = ssub.s32 1, %s4
  %s7 = scalar_select 0, %s6, %s4
  $region1: #{mlp_forward.1} parent=0
    #allocation2 [shape = 'u8[98304]{0}', space=vmem, size = 0x18000, scoped, tag = 'input window, operand 1, single buffered']
    #allocation3 [shape = 's32[1]{0}', space=sflag, size = 0x4, scoped, tag = 'scoped memory for mlp_forward.1']
    %8 = vsyncpa [#allocation3], 0
    // Predicated region
    $region2: #{mlp_forward.1} parent=1 // pred_check
      _
    $region3: #{mlp_forward.1} parent=1 // pred_check_branch
      %10 = sbr.rel (0) target = $region5
    $region4: #{mlp_forward.1} parent=1 // pred_region
      _
    $region5: #{mlp_forward.1} parent=1 // pred_fallthru
      _
    // Predicated region
    $region6: #{mlp_forward.1} parent=1 // pred_check
      _
    $region7: #{mlp_forward.1} parent=1 // pred_check_branch
      %12 = sbr.rel (0) target = $region9
    $region8: #{mlp_forward.1} parent=1 // pred_region
      %s14 = ssub.s32 3072, 3072
      %15 = vsyncadd [#allocation3], %s14
      %s16 = sshll.u32 [#allocation2], 4
      %s17 = int_to_ptr.vmem [resolvable:$true] %s16
      %22 = dma.hbm_to_vmem [thread:$0]  %s1, 3072, %s17, [#allocation3], 64, 64, 4
    $region9: #{mlp_forward.1} parent=1 // pred_fallthru
      _
    // Predicated region
    $region10: #{mlp_forward.1} parent=1 // pred_check
      _
    $region11: #{mlp_forward.1} parent=1 // pred_check_branch
      %24 = sbr.rel (0) target = $region13
    $region12: #{mlp_forward.1} parent=1 // pred_region
      _
    $region13: #{mlp_forward.1} parent=1 // pred_fallthru
      _
    // Predicated region
    $region14: #{mlp_forward.1} parent=1 // pred_check
      _
    $region15: #{mlp_forward.1} parent=1 // pred_check_branch
      %26 = sbr.rel (0) target = $region17
    $region16: #{mlp_forward.1} parent=1 // pred_region
      %27 = dma.done [#allocation3], 3072
    $region17: #{mlp_forward.1} parent=1 // pred_fallthru
      _
    %v29 = vld [vmem:[%s0] sm:$0xf]
    %v30 = vld [vmem:[#allocation2] sm:$0xf]
    %v31 = vld [vmem:[#allocation2 + $0x4] sm:$0xf]
    %v32 = vld [vmem:[#allocation2 + $0x8] sm:$0xf]
    %v33 = vld [vmem:[#allocation2 + $0xc] sm:$0xf]
    %v34 = vld [vmem:[#allocation2 + $0x10] sm:$0xf]
    %v35 = vld [vmem:[#allocation2 + $0x14] sm:$0xf]
    %v36 = vld [vmem:[#allocation2 + $0x18] sm:$0xf]
    %v37 = vld [vmem:[#allocation2 + $0x1c] sm:$0xf]
    %v38 = vld [vmem:[#allocation2 + $0x20] sm:$0xf]
    %v39 = vld [vmem:[#allocation2 + $0x24] sm:$0xf]
    %v40 = vld [vmem:[#allocation2 + $0x28] sm:$0xf]
    %v41 = vld [vmem:[#allocation2 + $0x2c] sm:$0xf]
    %v42 = vld [vmem:[#allocation2 + $0x30] sm:$0xf]
    %v43 = vld [vmem:[#allocation2 + $0x34] sm:$0xf]
    %v44 = vld [vmem:[#allocation2 + $0x38] sm:$0xf]
    %v45 = vld [vmem:[#allocation2 + $0x3c] sm:$0xf]
    %v46 = vld [vmem:[%s2] sm:$0xff]
    %v63 = vunpack.c.l.b16 %v30
    %v64 = vunpack.c.l.b16 %v31
    %v65 = vunpack.c.l.b16 %v32
    %v66 = vunpack.c.l.b16 %v33
    %v67 = vunpack.c.l.b16 %v34
    %v68 = vunpack.c.l.b16 %v35
    %v69 = vunpack.c.l.b16 %v36
    %v70 = vunpack.c.l.b16 %v37
    %v71 = vunpack.c.l.b16 %v38
    %v72 = vunpack.c.l.b16 %v39
    %v73 = vunpack.c.l.b16 %v40
    %v74 = vunpack.c.l.b16 %v41
    %v75 = vunpack.c.l.b16 %v42
    %v76 = vunpack.c.l.b16 %v43
    %v77 = vunpack.c.l.b16 %v44
    %v78 = vunpack.c.l.b16 %v45
    %v79 = vpack.c.b16 %v64, %v63
    %v80 = vpack.c.b16 %v66, %v65
    %v81 = vpack.c.b16 %v68, %v67
    %v82 = vpack.c.b16 %v70, %v69
    %v83 = vpack.c.b16 %v72, %v71
    %v84 = vpack.c.b16 %v74, %v73
    %v85 = vpack.c.b16 %v76, %v75
    %v86 = vpack.c.b16 %v78, %v77
    %95 = vmatprep.subr.bf16.mxu0 0
    %96 = vmatpush1.bf16.msra.mxu0 %v86
    %97 = vmatprep.subr.bf16.mxu0 0
    %98 = vmatpush1.bf16.msra.mxu0 %v85
    %99 = vmatprep.subr.bf16.mxu0 0
    %100 = vmatpush1.bf16.msra.mxu0 %v84
    %101 = vmatprep.subr.bf16.mxu0 0
    %102 = vmatpush1.bf16.msra.mxu0 %v83
    %103 = vmatprep.subr.bf16.mxu0 0
    %104 = vmatpush1.bf16.msra.mxu0 %v82
    %105 = vmatprep.subr.bf16.mxu0 0
    %106 = vmatpush1.bf16.msra.mxu0 %v81
    %107 = vmatprep.subr.bf16.mxu0 0
    %108 = vmatpush1.bf16.msra.mxu0 %v80
    %109 = vmatprep.subr.bf16.mxu0 0
    %110 = vmatpush1.bf16.msra.mxu0 %v79
    %111 = vmatprep.subr.bf16.mxu0 0
    %112 = vmatpush2.bf16.msra.mxu0 0
    %113 = vmatprep.subr.bf16.mxu0 0
    %114 = vmatpush2.bf16.msra.mxu0 0
    %115 = vmatprep.subr.bf16.mxu0 0
    %116 = vmatpush2.bf16.msra.mxu0 0
    %117 = vmatprep.subr.bf16.mxu0 0
    %118 = vmatpush2.bf16.msra.mxu0 0
    %119 = vmatprep.subr.bf16.mxu0 0
    %120 = vmatpush2.bf16.msra.mxu0 0
    %121 = vmatprep.subr.bf16.mxu0 0
    %122 = vmatpush2.bf16.msra.mxu0 0
    %123 = vmatprep.subr.bf16.mxu0 0
    %124 = vmatpush2.bf16.msra.mxu0 0
    %125 = vmatprep.subr.bf16.mxu0 0
    %126 = vmatpush2.bf16.msra.mxu0 0
    %127 = vmatprep.mubr.bf16.mxu0 0
    %128 = vmatmul.mubr.bf16.gmra.mxu0 %v29
    %v129 = vpop.f32.mrf.mxu0
    %v130 = vadd.f32 %v46, %v129
    %v131 = vpop.f32.mrf.mxu0
    %v132 = vpop.f32.mrf.mxu0
    %v133 = vpop.f32.mrf.mxu0
    %134 = vdwg.mxu0
    %v135 = vmax.f32 %v130, 0.0
    %v136 = vpack.c.bf16 %v135, %v135
    %s137 = scalar_lea.vmem [#allocation2], 64
    %v138 = vld [vmem:[%s137] sm:$0xf]
    %v139 = vld [vmem:[%s137 + $0x4] sm:$0xf]
    %v140 = vld [vmem:[%s137 + $0x8] sm:$0xf]
    %v141 = vld [vmem:[%s137 + $0xc] sm:$0xf]
    %v142 = vld [vmem:[%s137 + $0x10] sm:$0xf]
    %v143 = vld [vmem:[%s137 + $0x14] sm:$0xf]
    %v144 = vld [vmem:[%s137 + $0x18] sm:$0xf]
    %v145 = vld [vmem:[%s137 + $0x1c] sm:$0xf]
    %v146 = vld [vmem:[%s137 + $0x20] sm:$0xf]
    %v147 = vld [vmem:[%s137 + $0x24] sm:$0xf]
    %v148 = vld [vmem:[%s137 + $0x28] sm:$0xf]
    %v149 = vld [vmem:[%s137 + $0x2c] sm:$0xf]
    %v150 = vld [vmem:[%s137 + $0x30] sm:$0xf]
    %v151 = vld [vmem:[%s137 + $0x34] sm:$0xf]
    %v152 = vld [vmem:[%s137 + $0x38] sm:$0xf]
    %v153 = vld [vmem:[%s137 + $0x3c] sm:$0xf]
    %s154 = scalar_lea.vmem %s2, 8
    %v155 = vld [vmem:[%s154] sm:$0xff]
    %v172 = vunpack.c.l.b16 %v138
    %v173 = vunpack.c.l.b16 %v139
    %v174 = vunpack.c.l.b16 %v140
    %v175 = vunpack.c.l.b16 %v141
    %v176 = vunpack.c.l.b16 %v142
    %v177 = vunpack.c.l.b16 %v143
    %v178 = vunpack.c.l.b16 %v144
    %v179 = vunpack.c.l.b16 %v145
    %v180 = vunpack.c.l.b16 %v146
    %v181 = vunpack.c.l.b16 %v147
    %v182 = vunpack.c.l.b16 %v148
    %v183 = vunpack.c.l.b16 %v149
    %v184 = vunpack.c.l.b16 %v150
    %v185 = vunpack.c.l.b16 %v151
    %v186 = vunpack.c.l.b16 %v152
    %v187 = vunpack.c.l.b16 %v153
    %v188 = vpack.c.b16 %v173, %v172
    %v189 = vpack.c.b16 %v175, %v174
    %v190 = vpack.c.b16 %v177, %v176
    %v191 = vpack.c.b16 %v179, %v178
    %v192 = vpack.c.b16 %v181, %v180
    %v193 = vpack.c.b16 %v183, %v182
    %v194 = vpack.c.b16 %v185, %v184
    %v195 = vpack.c.b16 %v187, %v186
    %204 = vmatprep.subr.bf16.mxu0 0
    %205 = vmatpush1.bf16.msra.mxu0 %v195
    %206 = vmatprep.subr.bf16.mxu0 0
    %207 = vmatpush1.bf16.msra.mxu0 %v194
    %208 = vmatprep.subr.bf16.mxu0 0
    %209 = vmatpush1.bf16.msra.mxu0 %v193
    %210 = vmatprep.subr.bf16.mxu0 0
    %211 = vmatpush1.bf16.msra.mxu0 %v192
    %212 = vmatprep.subr.bf16.mxu0 0
    %213 = vmatpush1.bf16.msra.mxu0 %v191
    %214 = vmatprep.subr.bf16.mxu0 0
    %215 = vmatpush1.bf16.msra.mxu0 %v190
    %216 = vmatprep.subr.bf16.mxu0 0
    %217 = vmatpush1.bf16.msra.mxu0 %v189
    %218 = vmatprep.subr.bf16.mxu0 0
    %219 = vmatpush1.bf16.msra.mxu0 %v188
    %220 = vmatprep.subr.bf16.mxu0 0
    %221 = vmatpush2.bf16.msra.mxu0 0
    %222 = vmatprep.subr.bf16.mxu0 0
    %223 = vmatpush2.bf16.msra.mxu0 0
    %224 = vmatprep.subr.bf16.mxu0 0
    %225 = vmatpush2.bf16.msra.mxu0 0
    %226 = vmatprep.subr.bf16.mxu0 0
    %227 = vmatpush2.bf16.msra.mxu0 0
    %228 = vmatprep.subr.bf16.mxu0 0
    %229 = vmatpush2.bf16.msra.mxu0 0
    %230 = vmatprep.subr.bf16.mxu0 0
    %231 = vmatpush2.bf16.msra.mxu0 0
    %232 = vmatprep.subr.bf16.mxu0 0
    %233 = vmatpush2.bf16.msra.mxu0 0
    %234 = vmatprep.subr.bf16.mxu0 0
    %235 = vmatpush2.bf16.msra.mxu0 0
    %236 = vmatprep.mubr.bf16.mxu0 0
    %237 = vmatmul.mubr.bf16.gmra.mxu0 %v136
    %v238 = vpop.f32.mrf.mxu0
    %v239 = vadd.f32 %v155, %v238
    %v240 = vpop.f32.mrf.mxu0
    %v241 = vpop.f32.mrf.mxu0
    %v242 = vpop.f32.mrf.mxu0
    %243 = vdwg.mxu0
    %v244 = vmax.f32 %v239, 0.0
    %v245 = vpack.c.bf16 %v244, %v244
    %s246 = scalar_lea.vmem [#allocation2], 128
    %v247 = vld [vmem:[%s246] sm:$0xf]
    %v248 = vld [vmem:[%s246 + $0x4] sm:$0xf]
    %v249 = vld [vmem:[%s246 + $0x8] sm:$0xf]
    %v250 = vld [vmem:[%s246 + $0xc] sm:$0xf]
    %v251 = vld [vmem:[%s246 + $0x10] sm:$0xf]
    %v252 = vld [vmem:[%s246 + $0x14] sm:$0xf]
    %v253 = vld [vmem:[%s246 + $0x18] sm:$0xf]
    %v254 = vld [vmem:[%s246 + $0x1c] sm:$0xf]
    %v255 = vld [vmem:[%s246 + $0x20] sm:$0xf]
    %v256 = vld [vmem:[%s246 + $0x24] sm:$0xf]
    %v257 = vld [vmem:[%s246 + $0x28] sm:$0xf]
    %v258 = vld [vmem:[%s246 + $0x2c] sm:$0xf]
    %v259 = vld [vmem:[%s246 + $0x30] sm:$0xf]
    %v260 = vld [vmem:[%s246 + $0x34] sm:$0xf]
    %v261 = vld [vmem:[%s246 + $0x38] sm:$0xf]
    %v262 = vld [vmem:[%s246 + $0x3c] sm:$0xf]
    %s263 = scalar_lea.vmem %s2, 16
    %v264 = vld [vmem:[%s263] sm:$0xff]
    %v281 = vunpack.c.l.b16 %v247
    %v282 = vunpack.c.l.b16 %v248
    %v283 = vunpack.c.l.b16 %v249
    %v284 = vunpack.c.l.b16 %v250
    %v285 = vunpack.c.l.b16 %v251
    %v286 = vunpack.c.l.b16 %v252
    %v287 = vunpack.c.l.b16 %v253
    %v288 = vunpack.c.l.b16 %v254
    %v289 = vunpack.c.l.b16 %v255
    %v290 = vunpack.c.l.b16 %v256
    %v291 = vunpack.c.l.b16 %v257
    %v292 = vunpack.c.l.b16 %v258
    %v293 = vunpack.c.l.b16 %v259
    %v294 = vunpack.c.l.b16 %v260
    %v295 = vunpack.c.l.b16 %v261
    %v296 = vunpack.c.l.b16 %v262
    %v297 = vpack.c.b16 %v282, %v281
    %v298 = vpack.c.b16 %v284, %v283
    %v299 = vpack.c.b16 %v286, %v285
    %v300 = vpack.c.b16 %v288, %v287
    %v301 = vpack.c.b16 %v290, %v289
    %v302 = vpack.c.b16 %v292, %v291
    %v303 = vpack.c.b16 %v294, %v293
    %v304 = vpack.c.b16 %v296, %v295
    %313 = vmatprep.subr.bf16.mxu0 0
    %314 = vmatpush1.bf16.msra.mxu0 %v304
    %315 = vmatprep.subr.bf16.mxu0 0
    %316 = vmatpush1.bf16.msra.mxu0 %v303
    %317 = vmatprep.subr.bf16.mxu0 0
    %318 = vmatpush1.bf16.msra.mxu0 %v302
    %319 = vmatprep.subr.bf16.mxu0 0
    %320 = vmatpush1.bf16.msra.mxu0 %v301
    %321 = vmatprep.subr.bf16.mxu0 0
    %322 = vmatpush1.bf16.msra.mxu0 %v300
    %323 = vmatprep.subr.bf16.mxu0 0
    %324 = vmatpush1.bf16.msra.mxu0 %v299
    %325 = vmatprep.subr.bf16.mxu0 0
    %326 = vmatpush1.bf16.msra.mxu0 %v298
    %327 = vmatprep.subr.bf16.mxu0 0
    %328 = vmatpush1.bf16.msra.mxu0 %v297
    %329 = vmatprep.subr.bf16.mxu0 0
    %330 = vmatpush2.bf16.msra.mxu0 0
    %331 = vmatprep.subr.bf16.mxu0 0
    %332 = vmatpush2.bf16.msra.mxu0 0
    %333 = vmatprep.subr.bf16.mxu0 0
    %334 = vmatpush2.bf16.msra.mxu0 0
    %335 = vmatprep.subr.bf16.mxu0 0
    %336 = vmatpush2.bf16.msra.mxu0 0
    %337 = vmatprep.subr.bf16.mxu0 0
    %338 = vmatpush2.bf16.msra.mxu0 0
    %339 = vmatprep.subr.bf16.mxu0 0
    %340 = vmatpush2.bf16.msra.mxu0 0
    %341 = vmatprep.subr.bf16.mxu0 0
    %342 = vmatpush2.bf16.msra.mxu0 0
    %343 = vmatprep.subr.bf16.mxu0 0
    %344 = vmatpush2.bf16.msra.mxu0 0
    %345 = vmatprep.mubr.bf16.mxu0 0
    %346 = vmatmul.mubr.bf16.gmra.mxu0 %v245
    %v347 = vpop.f32.mrf.mxu0
    %v348 = vadd.f32 %v264, %v347
    %v349 = vpop.f32.mrf.mxu0
    %v350 = vpop.f32.mrf.mxu0
    %v351 = vpop.f32.mrf.mxu0
    %352 = vdwg.mxu0
    %v353 = vxor.u32 %v348, 2147483648
    %v354 = vmul.f32 %v353, 1.442695
    %v355 = vpow.pop %v354
    %v356 = vadd.f32 %v355, 1.0
    %v357 = vrcp.pop %v356
    %v358 = vmul.f32 1.0, %v357
    %359 = vst [vmem:[%s3] sm:$0xff] %v358
    // Predicated region
    $region18: #{mlp_forward.1} parent=1 // pred_check
      _
    $region19: #{mlp_forward.1} parent=1 // pred_check_branch
      %361 = sbr.rel (0) target = $region21
    $region20: #{mlp_forward.1} parent=1 // pred_region
      _
    $region21: #{mlp_forward.1} parent=1 // pred_fallthru
      _
    // Predicated region
    $region22: #{mlp_forward.1} parent=1 // pred_check
      _
    $region23: #{mlp_forward.1} parent=1 // pred_check_branch
      %363 = sbr.rel (0) target = $region25
    $region24: #{mlp_forward.1} parent=1 // pred_region
      _
    $region25: #{mlp_forward.1} parent=1 // pred_fallthru
      _
    %364 = vsyncpa [#allocation3], 1

</llo_original>
